<compile_context>
chip_gen: v7x
topology: tpu7x:2x2x1
jax: 0.10.0
libtpu: 0.0.40
codegen_flags: <defaults>
</compile_context>

<pallas_src>
import functools

import jax
import jax.numpy as jnp
from jax import lax
from jax.experimental import pallas as pl
from jax.experimental.pallas import tpu as pltpu

LANES = 128
_TILE_BYTES_TARGET = 8 * 1024 * 1024   # per input, per pipeline buffer
_CORE_SPLIT = 2                         # leading "parallel" axis (2 TCs on v7x)


def _dice_kernel(p_ref, t_ref, oxy_ref, os_ref, axy_ref, as_ref, *,
                 rows_total, block_rows, steps_per_core):
    c = pl.program_id(0)   # core-split axis ("parallel")
    i = pl.program_id(1)   # reduction axis ("arbitrary")

    @pl.when(i == 0)
    def _init():
        axy_ref[...] = jnp.zeros_like(axy_ref)
        as_ref[...] = jnp.zeros_like(as_ref)

    start = (c * steps_per_core + i) * block_rows
    valid = rows_total - start   # rows of this block that are in-range

    def _accum(p, t):
        xy = p * t
        s = p + t
        r = p.shape[0]
        if r % 8 == 0:
            # Group into vreg-shaped (8, LANES) slabs; pure VALU adds.
            axy_ref[...] += xy.reshape(r // 8, 8, LANES).sum(axis=0)
            as_ref[...] += s.reshape(r // 8, 8, LANES).sum(axis=0)
        else:
            # Tiny single-block inputs with rows not a multiple of 8.
            axy_ref[0:1, :] += jnp.sum(xy, axis=0, keepdims=True)
            as_ref[0:1, :] += jnp.sum(s, axis=0, keepdims=True)

    # Hot path: every block except (possibly) the globally-last one is fully
    # in-range -> no mask work at all.
    @pl.when(valid >= block_rows)
    def _full():
        _accum(p_ref[...].astype(jnp.float32), t_ref[...].astype(jnp.float32))

    # Cold path: at most one partial tail block per kernel invocation.
    @pl.when(valid < block_rows)
    def _tail():
        row_ids = lax.broadcasted_iota(jnp.int32, (block_rows, LANES), 0)
        mask = row_ids < valid
        p = jnp.where(mask, p_ref[...].astype(jnp.float32), 0.0)
        t = jnp.where(mask, t_ref[...].astype(jnp.float32), 0.0)
        _accum(p, t)

    @pl.when(i == steps_per_core - 1)
    def _finalize():
        oxy_ref[0] = axy_ref[...]
        os_ref[0] = as_ref[...]


def _vmem_budget_bytes():
    """Generation-aware scoped-VMEM budget (v7x has 64 MiB/TC, v5e/v6e 128)."""
    try:
        cap = int(pltpu.get_tpu_info().vmem_capacity_bytes)
    except Exception:
        cap = 64 * 1024 * 1024   # conservative minimum across generations
    return min(cap * 3 // 4, 96 * 1024 * 1024)


def binary_dice_loss(predict, target, smooth=1e-05, p=2, *, block_rows=None):
    assert predict.shape[0] == target.shape[0], \
        "predict & target batch size don't match"
    del p  # Reference forward never applies the power; kept for parity.

    pf = predict.reshape(-1)
    tf = target.reshape(-1)
    n = pf.shape[0]

    # Lane-aligned prefix goes to the kernel; the <128-element tail (if any)
    # is summed here (no full-array pad copy).
    n_main = (n // LANES) * LANES
    tail_xy = jnp.float32(0.0)
    tail_s = jnp.float32(0.0)
    if n_main < n:
        pt = pf[n_main:].astype(jnp.float32)
        tt = tf[n_main:].astype(jnp.float32)
        tail_xy = jnp.sum(pt * tt)
        tail_s = jnp.sum(pt) + jnp.sum(tt)

    if n_main == 0:   # fewer than 128 elements total: no kernel needed
        num = 2.0 * tail_xy + smooth
        den = tail_s + smooth
        return (1.0 - num / den).astype(jnp.float32)

    rows = n_main // LANES
    pm = pf[:n_main].reshape(rows, LANES)
    tm = tf[:n_main].reshape(rows, LANES)

    # ---- tile sizing (generation-aware) ----
    vmem_budget = _vmem_budget_bytes()
    itemsize = max(pm.dtype.itemsize, tm.dtype.itemsize)
    tile_bytes = min(_TILE_BYTES_TARGET, vmem_budget // 4)  # 2 in x 2 bufs
    if block_rows is None:
        block_rows = max(32, (tile_bytes // (LANES * itemsize)) // 32 * 32)

    if block_rows >= rows:
        # Single block covers everything.
        block_rows = rows
        split, spc = 1, 1
    else:
        # Resize blocks so split*spc blocks cover rows exactly (no redundant
        # clamped re-reads); split=2 feeds both TensorCores on v7x and is
        # ~free on single-TC chips.
        split = _CORE_SPLIT
        spc = pl.cdiv(rows, split * block_rows)
        block_rows = pl.cdiv(pl.cdiv(rows, split * spc), 32) * 32
        if (split * spc - 1) * block_rows >= rows:
            # Degenerate tiny case: simple single-core tiling.
            split = 1
            spc = pl.cdiv(rows, block_rows)

    grid = (split, spc)

    def in_map(c, i):
        return (c * spc + i, 0)

    kernel = functools.partial(
        _dice_kernel, rows_total=rows, block_rows=block_rows,
        steps_per_core=spc)

    cost = pl.CostEstimate(
        flops=3 * rows * LANES,
        transcendentals=0,
        bytes_accessed=pm.nbytes + tm.nbytes + 2 * split * 8 * LANES * 4)

    xy_part, s_part = pl.pallas_call(
        kernel,
        out_shape=(jax.ShapeDtypeStruct((split, 8, LANES), jnp.float32),
                   jax.ShapeDtypeStruct((split, 8, LANES), jnp.float32)),
        grid_spec=pltpu.PrefetchScalarGridSpec(
            num_scalar_prefetch=0,
            grid=grid,
            in_specs=[
                pl.BlockSpec((block_rows, LANES), in_map),
                pl.BlockSpec((block_rows, LANES), in_map),
            ],
            out_specs=[
                pl.BlockSpec((1, 8, LANES), lambda c, i: (c, 0, 0)),
                pl.BlockSpec((1, 8, LANES), lambda c, i: (c, 0, 0)),
            ],
            scratch_shapes=[
                pltpu.VMEM((8, LANES), jnp.float32),   # per-lane sum(x * y)
                pltpu.VMEM((8, LANES), jnp.float32),   # per-lane sum(x + y)
            ],
        ),
        compiler_params=pltpu.CompilerParams(
            dimension_semantics=("parallel", "arbitrary"),
            vmem_limit_bytes=vmem_budget),
        cost_estimate=cost,
    )(pm, tm)

    # Tiny finalize on (split, 8, 128) partials; fold sum(x)+sum(y)==sum(x+y).
    num = 2.0 * (jnp.sum(xy_part) + tail_xy) + smooth
    den = jnp.sum(s_part) + tail_s + smooth
    return 1.0 - num / den


def _reference(predict, target, smooth=1e-05):
    pf = predict.reshape(predict.shape[0], -1).astype(jnp.float32)
    tf = target.reshape(target.shape[0], -1).astype(jnp.float32)
    num = jnp.sum(pf * tf) * 2 + smooth
    den = jnp.sum(pf) + jnp.sum(tf) + smooth
    return 1.0 - num / den


if __name__ == "__main__":
    key = jax.random.PRNGKey(0)
    k1, k2, k3, k4 = jax.random.split(key, 4)

    # Primary check: (N, C, H, W) = (2, 4, 16, 16), 128-aligned element count.
    predict = jax.nn.sigmoid(jax.random.normal(k1, (2, 4, 16, 16), jnp.float32))
    target = (jax.random.uniform(k2, (2, 4, 16, 16)) > 0.5).astype(jnp.float32)
    loss = jax.block_until_ready(binary_dice_loss(predict, target))
    ref = _reference(predict, target)
    assert jnp.allclose(loss, ref, rtol=1e-5, atol=1e-6), (loss, ref)

    # Secondary check: non-128-aligned element count exercises the wrapper
    # tail path (no pad copy).
    predict2 = jax.nn.sigmoid(jax.random.normal(k3, (2, 1049), jnp.float32))
    target2 = (jax.random.uniform(k4, (2, 1049)) > 0.5).astype(jnp.float32)
    loss2 = jax.block_until_ready(binary_dice_loss(predict2, target2))
    ref2 = _reference(predict2, target2)
    assert jnp.allclose(loss2, ref2, rtol=1e-5, atol=1e-6), (loss2, ref2)

    print("KERNEL_OK")
</pallas_src>

<mosaic_0001>
module attributes {stable_mosaic.version = 11 : i64} {
  func.func @_dice_kernel(%arg0: i32, %arg1: i32, %arg2: memref<16x128xf32, #tpu.memory_space<vmem>>, %arg3: memref<16x128xf32, #tpu.memory_space<vmem>>, %arg4: memref<1x8x128xf32, #tpu.memory_space<vmem>>, %arg5: memref<1x8x128xf32, #tpu.memory_space<vmem>>, %arg6: memref<8x128xf32, #tpu.memory_space<vmem>>, %arg7: memref<8x128xf32, #tpu.memory_space<vmem>>) attributes {dimension_semantics = [#tpu.dimension_semantics<parallel>, #tpu.dimension_semantics<arbitrary>], iteration_bounds = array<i64: 1, 1>, scalar_prefetch = 0 : i64, scratch_operands = 2 : i64, tpu.core_type = #tpu.core_type<tc>, window_params = [{transform_indices = @transform_0, window_bounds = array<i64: 16, 128>}, {transform_indices = @transform_1, window_bounds = array<i64: 16, 128>}, {transform_indices = @transform_2, window_bounds = array<i64: 1, 8, 128>}, {transform_indices = @transform_3, window_bounds = array<i64: 1, 8, 128>}]} {
    %c0_i32 = arith.constant 0 : i32
    %0 = arith.cmpi eq, %arg1, %c0_i32 : i32
    %1 = arith.extui %0 : i1 to i32
    %c0_i32_0 = arith.constant 0 : i32
    %2 = arith.cmpi ne, %1, %c0_i32_0 : i32
    scf.if %2 {
      %cst = arith.constant 0.000000e+00 : f32
      %16 = vector.broadcast %cst : f32 to vector<8x128xf32>
      %c0 = arith.constant 0 : index
      %c0_8 = arith.constant 0 : index
      %17 = vector.load %arg6[%c0, %c0_8] : memref<8x128xf32, #tpu.memory_space<vmem>>, vector<8x128xf32>
      tpu.vector_store %arg6[%c0, %c0_8], %16 {strides = array<i32>} : memref<8x128xf32, #tpu.memory_space<vmem>>, vector<8x128xf32>,
      %cst_9 = arith.constant 0.000000e+00 : f32
      %18 = vector.broadcast %cst_9 : f32 to vector<8x128xf32>
      %c0_10 = arith.constant 0 : index
      %c0_11 = arith.constant 0 : index
      %19 = vector.load %arg7[%c0_10, %c0_11] : memref<8x128xf32, #tpu.memory_space<vmem>>, vector<8x128xf32>
      tpu.vector_store %arg7[%c0_10, %c0_11], %18 {strides = array<i32>} : memref<8x128xf32, #tpu.memory_space<vmem>>, vector<8x128xf32>,
    } else {
    }
    %c1_i32 = arith.constant 1 : i32
    %3 = arith.muli %arg0, %c1_i32 : i32
    %4 = arith.addi %3, %arg1 : i32
    %c16_i32 = arith.constant 16 : i32
    %5 = arith.muli %4, %c16_i32 : i32
    %c16_i32_1 = arith.constant 16 : i32
    %6 = arith.subi %c16_i32_1, %5 : i32
    %c16_i32_2 = arith.constant 16 : i32
    %7 = arith.cmpi sge, %6, %c16_i32_2 : i32
    %8 = arith.extui %7 : i1 to i32
    %c0_i32_3 = arith.constant 0 : i32
    %9 = arith.cmpi ne, %8, %c0_i32_3 : i32
    scf.if %9 {
      %c0 = arith.constant 0 : index
      %c0_8 = arith.constant 0 : index
      %16 = vector.load %arg2[%c0, %c0_8] : memref<16x128xf32, #tpu.memory_space<vmem>>, vector<16x128xf32>
      %c0_9 = arith.constant 0 : index
      %c0_10 = arith.constant 0 : index
      %17 = vector.load %arg3[%c0_9, %c0_10] : memref<16x128xf32, #tpu.memory_space<vmem>>, vector<16x128xf32>
      %18 = arith.mulf %16, %17 : vector<16x128xf32>
      %19 = arith.addf %16, %17 : vector<16x128xf32>
      %c0_11 = arith.constant 0 : index
      %c0_12 = arith.constant 0 : index
      %20 = vector.load %arg6[%c0_11, %c0_12] : memref<8x128xf32, #tpu.memory_space<vmem>>, vector<8x128xf32>
      %21 = vector.shape_cast %18 : vector<16x128xf32> to vector<2x8x128xf32>
      %cst = arith.constant dense<0.000000e+00> : vector<8x128xf32>
      %22 = vector.multi_reduction <add>, %21, %cst [0] : vector<2x8x128xf32> to vector<8x128xf32>
      %23 = arith.addf %20, %22 : vector<8x128xf32>
      %c0_13 = arith.constant 0 : index
      %c0_14 = arith.constant 0 : index
      %24 = vector.load %arg6[%c0_13, %c0_14] : memref<8x128xf32, #tpu.memory_space<vmem>>, vector<8x128xf32>
      tpu.vector_store %arg6[%c0_13, %c0_14], %23 {strides = array<i32>} : memref<8x128xf32, #tpu.memory_space<vmem>>, vector<8x128xf32>,
      %c0_15 = arith.constant 0 : index
      %c0_16 = arith.constant 0 : index
      %25 = vector.load %arg7[%c0_15, %c0_16] : memref<8x128xf32, #tpu.memory_space<vmem>>, vector<8x128xf32>
      %26 = vector.shape_cast %19 : vector<16x128xf32> to vector<2x8x128xf32>
      %cst_17 = arith.constant dense<0.000000e+00> : vector<8x128xf32>
      %27 = vector.multi_reduction <add>, %26, %cst_17 [0] : vector<2x8x128xf32> to vector<8x128xf32>
      %28 = arith.addf %25, %27 : vector<8x128xf32>
      %c0_18 = arith.constant 0 : index
      %c0_19 = arith.constant 0 : index
      %29 = vector.load %arg7[%c0_18, %c0_19] : memref<8x128xf32, #tpu.memory_space<vmem>>, vector<8x128xf32>
      tpu.vector_store %arg7[%c0_18, %c0_19], %28 {strides = array<i32>} : memref<8x128xf32, #tpu.memory_space<vmem>>, vector<8x128xf32>,
    } else {
    }
    %c16_i32_4 = arith.constant 16 : i32
    %10 = arith.cmpi slt, %6, %c16_i32_4 : i32
    %11 = arith.extui %10 : i1 to i32
    %c0_i32_5 = arith.constant 0 : i32
    %12 = arith.cmpi ne, %11, %c0_i32_5 : i32
    scf.if %12 {
      %16 = tpu.iota {dimensions = array<i32: 0>} : vector<16x128xi32>
      %17 = vector.broadcast %6 : i32 to vector<16x128xi32>
      %18 = arith.cmpi slt, %16, %17 : vector<16x128xi32>
      %c0 = arith.constant 0 : index
      %c0_8 = arith.constant 0 : index
      %19 = vector.load %arg2[%c0, %c0_8] : memref<16x128xf32, #tpu.memory_space<vmem>>, vector<16x128xf32>
      %cst = arith.constant 0.000000e+00 : f32
      %20 = vector.broadcast %cst : f32 to vector<16x128xf32>
      %21 = arith.select %18, %19, %20 : vector<16x128xi1>, vector<16x128xf32>
      %c0_9 = arith.constant 0 : index
      %c0_10 = arith.constant 0 : index
      %22 = vector.load %arg3[%c0_9, %c0_10] : memref<16x128xf32, #tpu.memory_space<vmem>>, vector<16x128xf32>
      %cst_11 = arith.constant 0.000000e+00 : f32
      %23 = vector.broadcast %cst_11 : f32 to vector<16x128xf32>
      %24 = arith.select %18, %22, %23 : vector<16x128xi1>, vector<16x128xf32>
      %25 = arith.mulf %21, %24 : vector<16x128xf32>
      %26 = arith.addf %21, %24 : vector<16x128xf32>
      %c0_12 = arith.constant 0 : index
      %c0_13 = arith.constant 0 : index
      %27 = vector.load %arg6[%c0_12, %c0_13] : memref<8x128xf32, #tpu.memory_space<vmem>>, vector<8x128xf32>
      %28 = vector.shape_cast %25 : vector<16x128xf32> to vector<2x8x128xf32>
      %cst_14 = arith.constant dense<0.000000e+00> : vector<8x128xf32>
      %29 = vector.multi_reduction <add>, %28, %cst_14 [0] : vector<2x8x128xf32> to vector<8x128xf32>
      %30 = arith.addf %27, %29 : vector<8x128xf32>
      %c0_15 = arith.constant 0 : index
      %c0_16 = arith.constant 0 : index
      %31 = vector.load %arg6[%c0_15, %c0_16] : memref<8x128xf32, #tpu.memory_space<vmem>>, vector<8x128xf32>
      tpu.vector_store %arg6[%c0_15, %c0_16], %30 {strides = array<i32>} : memref<8x128xf32, #tpu.memory_space<vmem>>, vector<8x128xf32>,
      %c0_17 = arith.constant 0 : index
      %c0_18 = arith.constant 0 : index
      %32 = vector.load %arg7[%c0_17, %c0_18] : memref<8x128xf32, #tpu.memory_space<vmem>>, vector<8x128xf32>
      %33 = vector.shape_cast %26 : vector<16x128xf32> to vector<2x8x128xf32>
      %cst_19 = arith.constant dense<0.000000e+00> : vector<8x128xf32>
      %34 = vector.multi_reduction <add>, %33, %cst_19 [0] : vector<2x8x128xf32> to vector<8x128xf32>
      %35 = arith.addf %32, %34 : vector<8x128xf32>
      %c0_20 = arith.constant 0 : index
      %c0_21 = arith.constant 0 : index
      %36 = vector.load %arg7[%c0_20, %c0_21] : memref<8x128xf32, #tpu.memory_space<vmem>>, vector<8x128xf32>
      tpu.vector_store %arg7[%c0_20, %c0_21], %35 {strides = array<i32>} : memref<8x128xf32, #tpu.memory_space<vmem>>, vector<8x128xf32>,
    } else {
    }
    %c0_i32_6 = arith.constant 0 : i32
    %13 = arith.cmpi eq, %arg1, %c0_i32_6 : i32
    %14 = arith.extui %13 : i1 to i32
    %c0_i32_7 = arith.constant 0 : i32
    %15 = arith.cmpi ne, %14, %c0_i32_7 : i32
    scf.if %15 {
      %c0 = arith.constant 0 : index
      %c0_8 = arith.constant 0 : index
      %16 = vector.load %arg6[%c0, %c0_8] : memref<8x128xf32, #tpu.memory_space<vmem>>, vector<8x128xf32>
      %c0_9 = arith.constant 0 : index
      %c0_10 = arith.constant 0 : index
      %c0_11 = arith.constant 0 : index
      %17 = vector.load %arg4[%c0_9, %c0_10, %c0_11] : memref<1x8x128xf32, #tpu.memory_space<vmem>>, vector<1x8x128xf32>
      %18 = vector.shape_cast %17 : vector<1x8x128xf32> to vector<8x128xf32>
      %19 = vector.shape_cast %16 : vector<8x128xf32> to vector<1x8x128xf32>
      tpu.vector_store %arg4[%c0_9, %c0_10, %c0_11], %19 {strides = array<i32>} : memref<1x8x128xf32, #tpu.memory_space<vmem>>, vector<1x8x128xf32>,
      %c0_12 = arith.constant 0 : index
      %c0_13 = arith.constant 0 : index
      %20 = vector.load %arg7[%c0_12, %c0_13] : memref<8x128xf32, #tpu.memory_space<vmem>>, vector<8x128xf32>
      %c0_14 = arith.constant 0 : index
      %c0_15 = arith.constant 0 : index
      %c0_16 = arith.constant 0 : index
      %21 = vector.load %arg5[%c0_14, %c0_15, %c0_16] : memref<1x8x128xf32, #tpu.memory_space<vmem>>, vector<1x8x128xf32>
      %22 = vector.shape_cast %21 : vector<1x8x128xf32> to vector<8x128xf32>
      %23 = vector.shape_cast %20 : vector<8x128xf32> to vector<1x8x128xf32>
      tpu.vector_store %arg5[%c0_14, %c0_15, %c0_16], %23 {strides = array<i32>} : memref<1x8x128xf32, #tpu.memory_space<vmem>>, vector<1x8x128xf32>,
    } else {
    }
    return
  }
  func.func @transform_0(%arg0: i32, %arg1: i32) -> (i32, i32) {
    %c1_i32 = arith.constant 1 : i32
    %0 = arith.muli %arg0, %c1_i32 : i32
    %1 = arith.addi %0, %arg1 : i32
    %c0_i32 = arith.constant 0 : i32
    %c0_i32_0 = arith.constant 0 : i32
    return %1, %c0_i32 : i32, i32
  }
  func.func @transform_1(%arg0: i32, %arg1: i32) -> (i32, i32) {
    %c1_i32 = arith.constant 1 : i32
    %0 = arith.muli %arg0, %c1_i32 : i32
    %1 = arith.addi %0, %arg1 : i32
    %c0_i32 = arith.constant 0 : i32
    %c0_i32_0 = arith.constant 0 : i32
    return %1, %c0_i32 : i32, i32
  }
  func.func @transform_2(%arg0: i32, %arg1: i32) -> (i32, i32, i32) {
    %c0_i32 = arith.constant 0 : i32
    %c0_i32_0 = arith.constant 0 : i32
    %c0_i32_1 = arith.constant 0 : i32
    return %arg0, %c0_i32, %c0_i32_0 : i32, i32, i32
  }
  func.func @transform_3(%arg0: i32, %arg1: i32) -> (i32, i32, i32) {
    %c0_i32 = arith.constant 0 : i32
    %c0_i32_0 = arith.constant 0 : i32
    %c0_i32_1 = arith.constant 0 : i32
    return %arg0, %c0_i32, %c0_i32_0 : i32, i32, i32
  }
}

</mosaic_0001>

<llo_original>
// kernel: tpu_custom_call.1
$region0: #{tpu_custom_call.1}
  #allocation0 [shape = 'u32[]', space=smem, size = 0x4, offset = 0x4, fixed_abs, tag = 'smem constant byte address 0x4 - core index']
  #allocation1 [shape = 'u32[144,128]{1,0:T(1,128)}', space=vmem, size = 0x12000, scoped, tag = 'internal scratch']
  #allocation2 [shape = 'f32[8,128]{1,0:T(8,128)}', space=vmem, size = 0x1000, scoped, tag = 'scratch operand']
  #allocation3 [shape = 'f32[8,128]{1,0:T(8,128)}', space=vmem, size = 0x1000, scoped, tag = 'scratch operand']
  %s0 = inlined_call_operand.hbm [shape: f32[16,128], index: 0, kind: input, shape index: {}]
  %s1 = inlined_call_operand.hbm [shape: f32[16,128], index: 1, kind: input, shape index: {}]
  %s2 = inlined_call_operand.hbm [shape: f32[1,8,128], index: 2, kind: output, shape index: {0}]
  %s3 = inlined_call_operand.hbm [shape: f32[1,8,128], index: 3, kind: output, shape index: {1}]
  %4 = xla_tuple %s2, %s3
  %s5 = sld [smem:[#allocation0]]
  $region50: #{tpu_custom_call.1} parent=0
    _
  %s7 = ssub.s32 1, %s5
  %s8 = scalar_select 0, %s7, %s5
  $region1: #{tpu_custom_call.1} parent=0
    #allocation4 [shape = 'u8[8192]{0}', space=vmem, size = 0x2000, scoped, tag = 'input window, operand 0, single buffered']
    #allocation5 [shape = 's32[1]{0}', space=sflag, size = 0x4, scoped, tag = 'scoped memory for tpu_custom_call.1']
    #allocation6 [shape = 's32[1]{0}', space=sflag, size = 0x4, scoped, tag = 'scoped memory for tpu_custom_call.1']
    #allocation7 [shape = 'u8[8192]{0}', space=vmem, size = 0x2000, scoped, tag = 'input window, operand 1, single buffered']
    #allocation8 [shape = 's32[1]{0}', space=sflag, size = 0x4, scoped, tag = 'scoped memory for tpu_custom_call.1']
    #allocation9 [shape = 'u8[4096]{0}', space=vmem, size = 0x1000, scoped, tag = 'output window, operand 0, single buffered']
    #allocation10 [shape = 'u8[4096]{0}', space=vmem, size = 0x1000, scoped, tag = 'output window, operand 1, single buffered']
    #allocation11 [shape = 's32[1]{0}', space=sflag, size = 0x4, scoped, tag = 'scoped memory for tpu_custom_call.1']
    %9 = vsyncpa [#allocation5], 0
    %10 = vsyncpa [#allocation8], 0
    %11 = vsyncpa [#allocation6], 0
    %12 = vsyncpa [#allocation11], 0
    // Predicated region
    $region2: #{tpu_custom_call.1} parent=1 // pred_check
      _
    $region3: #{tpu_custom_call.1} parent=1 // pred_check_branch
      %14 = sbr.rel (0) target = $region5
    $region4: #{tpu_custom_call.1} parent=1 // pred_region
      %s15 = sadd.s32 0, 0
      %s16 = smul.u32 2, %s15
      %s18 = ssub.s32 256, 256
      %19 = vsyncadd [#allocation5], %s18
      %s20 = smul.addr %s16, 128
      %s21 = scalar_lea.hbm %s0, %s20
      %s22 = sshll.u32 [#allocation4], 4
      %s23 = int_to_ptr.vmem [resolvable:$true] %s22
      %28 = dma.hbm_to_vmem [thread:$0]  %s21, 256, %s23, [#allocation5], 128, 128, 8
    $region5: #{tpu_custom_call.1} parent=1 // pred_fallthru
      _
    // Predicated region
    $region6: #{tpu_custom_call.1} parent=1 // pred_check
      _
    $region7: #{tpu_custom_call.1} parent=1 // pred_check_branch
      %30 = sbr.rel (0) target = $region9
    $region8: #{tpu_custom_call.1} parent=1 // pred_region
      %s31 = sadd.s32 0, 0
      %s32 = smul.u32 2, %s31
      %s34 = ssub.s32 256, 256
      %35 = vsyncadd [#allocation8], %s34
      %s36 = smul.addr %s32, 128
      %s37 = scalar_lea.hbm %s1, %s36
      %s38 = sshll.u32 [#allocation7], 4
      %s39 = int_to_ptr.vmem [resolvable:$true] %s38
      %44 = dma.hbm_to_vmem [thread:$0]  %s37, 256, %s39, [#allocation8], 128, 128, 8
    $region9: #{tpu_custom_call.1} parent=1 // pred_fallthru
      _
    // Predicated region
    $region10: #{tpu_custom_call.1} parent=1 // pred_check
      _
    $region11: #{tpu_custom_call.1} parent=1 // pred_check_branch
      %46 = sbr.rel (0) target = $region13
    $region12: #{tpu_custom_call.1} parent=1 // pred_region
      %47 = dma.done [#allocation5], 256
    $region13: #{tpu_custom_call.1} parent=1 // pred_fallthru
      _
    // Predicated region
    $region14: #{tpu_custom_call.1} parent=1 // pred_check
      _
    $region15: #{tpu_custom_call.1} parent=1 // pred_check_branch
      %49 = sbr.rel (0) target = $region17
    $region16: #{tpu_custom_call.1} parent=1 // pred_region
      %50 = dma.done [#allocation8], 256
    $region17: #{tpu_custom_call.1} parent=1 // pred_fallthru
      _
    %s51 = sadd.s32 0, 0
    %s52 = smul.u32 2, %s51
    %s53 = sadd.s32 0, 0
    %s54 = smul.u32 2, %s53
    %p55 = scmp.eq.s32.totalorder 0, 0
    // Predicated region
    $region18: #{tpu_custom_call.1} parent=1 // pred_check
      %p56 = pneg %p55
    $region19: #{tpu_custom_call.1} parent=1 // pred_check_branch
      %58 = sbr.rel (%p56) target = $region21
    $region20: #{tpu_custom_call.1} parent=1 // pred_region
      %59 = vst [vmem:[#allocation2] sm:$0xff] 0.0
      %60 = vst [vmem:[#allocation3] sm:$0xff] 0.0
    $region21: #{tpu_custom_call.1} parent=1 // pred_fallthru
      _
    %s61 = sadd.s32 0, 0
    %s62 = smul.u32 %s61, 16
    %s63 = ssub.s32 16, %s62
    %p64 = scmp.ge.s32.totalorder %s63, 16
    // Predicated region
    $region22: #{tpu_custom_call.1} parent=1 // pred_check
      %p65 = pneg %p64
    $region23: #{tpu_custom_call.1} parent=1 // pred_check_branch
      %67 = sbr.rel (%p65) target = $region25
    $region24: #{tpu_custom_call.1} parent=1 // pred_region
      %v68 = vld [vmem:[#allocation4] sm:$0xff]
      %v69 = vld [vmem:[#allocation4 + $0x8] sm:$0xff]
      %v70 = vld [vmem:[#allocation7] sm:$0xff]
      %v71 = vld [vmem:[#allocation7 + $0x8] sm:$0xff]
      %v72 = vmul.f32 %v68, %v70
      %v73 = vmul.f32 %v69, %v71
      %v74 = vadd.f32 %v68, %v70
      %v75 = vadd.f32 %v69, %v71
      %v76 = vld [vmem:[#allocation2] sm:$0xff]
      %v77 = vadd.f32 %v72, %v73
      %v78 = vadd.f32 %v76, %v77
      %79 = vst [vmem:[#allocation2] sm:$0xff] %v78
      %v80 = vld [vmem:[#allocation3] sm:$0xff]
      %v81 = vadd.f32 %v74, %v75
      %v82 = vadd.f32 %v80, %v81
      %83 = vst [vmem:[#allocation3] sm:$0xff] %v82
    $region25: #{tpu_custom_call.1} parent=1 // pred_fallthru
      _
    %p84 = scmp.lt.s32.totalorder %s63, 16
    // Predicated region
    $region26: #{tpu_custom_call.1} parent=1 // pred_check
      %p85 = pneg %p84
    $region27: #{tpu_custom_call.1} parent=1 // pred_check_branch
      %87 = sbr.rel (%p85) target = $region29
    $region28: #{tpu_custom_call.1} parent=1 // pred_region
      %v88 = vlaneseq
      %v89 = vshrl.u32 %v88, 7
      %v90 = vadd.s32 %v89, 8
      %v91 = vstv %s63
      %vm92 = vcmp.lt.s32.totalorder %v89, %v91
      %vm93 = vcmp.lt.s32.totalorder %v90, %v91
      %v94 = vld [vmem:[#allocation4] sm:$0xff]
      %v95 = vld [vmem:[#allocation4 + $0x8] sm:$0xff]
      %v96 = vsel %vm92, %v94, 0.0
      %v97 = vsel %vm93, %v95, 0.0
      %v98 = vld [vmem:[#allocation7] sm:$0xff]
      %v99 = vld [vmem:[#allocation7 + $0x8] sm:$0xff]
      %v100 = vsel %vm92, %v98, 0.0
      %v101 = vsel %vm93, %v99, 0.0
      %v102 = vmul.f32 %v96, %v100
      %v103 = vmul.f32 %v97, %v101
      %v104 = vadd.f32 %v96, %v100
      %v105 = vadd.f32 %v97, %v101
      %v106 = vld [vmem:[#allocation2] sm:$0xff]
      %v107 = vadd.f32 %v102, %v103
      %v108 = vadd.f32 %v106, %v107
      %109 = vst [vmem:[#allocation2] sm:$0xff] %v108
      %v110 = vld [vmem:[#allocation3] sm:$0xff]
      %v111 = vadd.f32 %v104, %v105
      %v112 = vadd.f32 %v110, %v111
      %113 = vst [vmem:[#allocation3] sm:$0xff] %v112
    $region29: #{tpu_custom_call.1} parent=1 // pred_fallthru
      _
    // Predicated region
    $region30: #{tpu_custom_call.1} parent=1 // pred_check
      %p114 = pneg %p55
    $region31: #{tpu_custom_call.1} parent=1 // pred_check_branch
      %116 = sbr.rel (%p114) target = $region33
    $region32: #{tpu_custom_call.1} parent=1 // pred_region
      %v117 = vld [vmem:[#allocation2] sm:$0xff]
      %118 = vst [vmem:[#allocation9] sm:$0xff] %v117
      %v119 = vld [vmem:[#allocation3] sm:$0xff]
      %120 = vst [vmem:[#allocation10] sm:$0xff] %v119
    $region33: #{tpu_custom_call.1} parent=1 // pred_fallthru
      _
    // Predicated region
    $region34: #{tpu_custom_call.1} parent=1 // pred_check
      _
    $region35: #{tpu_custom_call.1} parent=1 // pred_check_branch
      %122 = sbr.rel (0) target = $region37
    $region36: #{tpu_custom_call.1} parent=1 // pred_region
      %s124 = ssub.s32 128, 128
      %125 = vsyncadd [#allocation6], %s124
      %s127 = sshll.u32 [#allocation9], 4
      %s128 = int_to_ptr.vmem [resolvable:$true] %s127
      %130 = dma.vmem_to_hbm [thread:$0]  %s128, 128, %s2, [#allocation6]
    $region37: #{tpu_custom_call.1} parent=1 // pred_fallthru
      _
    // Predicated region
    $region38: #{tpu_custom_call.1} parent=1 // pred_check
      _
    $region39: #{tpu_custom_call.1} parent=1 // pred_check_branch
      %132 = sbr.rel (0) target = $region41
    $region40: #{tpu_custom_call.1} parent=1 // pred_region
      %s134 = ssub.s32 128, 128
      %135 = vsyncadd [#allocation11], %s134
      %s137 = sshll.u32 [#allocation10], 4
      %s138 = int_to_ptr.vmem [resolvable:$true] %s137
      %140 = dma.vmem_to_hbm [thread:$0]  %s138, 128, %s3, [#allocation11]
    $region41: #{tpu_custom_call.1} parent=1 // pred_fallthru
      _
    // Predicated region
    $region42: #{tpu_custom_call.1} parent=1 // pred_check
      _
    $region43: #{tpu_custom_call.1} parent=1 // pred_check_branch
      %142 = sbr.rel (0) target = $region45
    $region44: #{tpu_custom_call.1} parent=1 // pred_region
      %143 = dma.done [#allocation6], 128
    $region45: #{tpu_custom_call.1} parent=1 // pred_fallthru
      _
    // Predicated region
    $region46: #{tpu_custom_call.1} parent=1 // pred_check
      _
    $region47: #{tpu_custom_call.1} parent=1 // pred_check_branch
      %145 = sbr.rel (0) target = $region49
    $region48: #{tpu_custom_call.1} parent=1 // pred_region
      %146 = dma.done [#allocation11], 128
    $region49: #{tpu_custom_call.1} parent=1 // pred_fallthru
      _
    %147 = vsyncpa [#allocation5], 1
    %148 = vsyncpa [#allocation8], 1
    %149 = vsyncpa [#allocation6], 1
    %150 = vsyncpa [#allocation11], 1

</llo_original>
